<compile_context>
chip_gen: v5e
topology: v5e:2x2
jax: 0.10.0
libtpu: 0.0.40
codegen_flags: <defaults>
</compile_context>

<pallas_src>
import functools

import jax
import jax.numpy as jnp
from jax.experimental import pallas as pl
from jax.experimental.pallas import tpu as pltpu


# ---------------------------------------------------------------------------
# Geometry / VMEM helpers
# ---------------------------------------------------------------------------
def _round_up(x, m):
    return ((x + m - 1) // m) * m


def _detect_vmem_capacity_bytes():
    try:
        return int(pltpu.get_tpu_info().vmem_capacity_bytes)
    except Exception:
        return 64 * 1024 * 1024          # v7x-safe fallback (64 MiB / TC)


_VMEM_CAP = _detect_vmem_capacity_bytes()
_VMEM_BUDGET = int(0.60 * _VMEM_CAP)      # ~38 MiB on v7x, ~76 MiB on v5e/v6e
_VMEM_LIMIT = int(0.80 * _VMEM_CAP)       # scoped-VMEM limit handed to Mosaic
_TM_TARGET = 2048 if _VMEM_CAP >= 96 * 1024 * 1024 else 512


def _vmem_bytes_estimate(tm, f_pad, num_layers, g_pad, w_itemsize):
    """Conservative live-VMEM estimate for one grid step (double-buffered I/O)."""
    f_cat = (num_layers + 1) * f_pad
    x_tile = tm * f_pad * 2                   # bf16 node-feature tile
    seg_tile = tm * 4                         # int32 graph ids
    out_slab = g_pad * f_cat * 4              # resident f32 pooled accumulator
    w_res = num_layers * f_pad * f_pad * w_itemsize
    vecs = 3 * num_layers * f_pad * 4         # bias / gamma / beta
    onehot = g_pad * tm * 2                   # bf16 one-hot segment matrix
    temps = 5 * tm * f_pad * 4                # resident f32 x + layer temporaries
    return (2 * (x_tile + seg_tile + w_res + vecs + out_slab)
            + onehot + temps)


# ---------------------------------------------------------------------------
# Fused kernel: full MLP_module stack + per-graph pooled-sum accumulator
# ---------------------------------------------------------------------------
def _fused_mlp_stack_kernel(x_ref, seg_ref, w_ref, b_ref, g_ref, bt_ref,
                            alpha_ref, pooled_ref, *, num_layers, f_real,
                            residual):
    tm, f_pad = x_ref.shape
    g_pad = pooled_ref.shape[0]

    # Resident accumulator: zero once, accumulate every grid step.
    @pl.when(pl.program_id(0) == 0)
    def _init():
        pooled_ref[...] = jnp.zeros_like(pooled_ref)

    x_bf16 = x_ref[...]                                   # (tm, f_pad) bf16
    x = x_bf16.astype(jnp.float32)                        # f32 residual carrier

    # Transposed one-hot segment matrix (g_pad, tm) in bf16 (0/1 exact); row g
    # flags the nodes of graph g.  Padded rows carry segment id -1 -> no match.
    seg = seg_ref[...]                                    # (1, tm) int32
    gids = jax.lax.broadcasted_iota(jnp.int32, (g_pad, tm), 0)
    onehot_t = (gids == seg).astype(jnp.bfloat16)         # (g_pad, tm)

    # Mask of real feature lanes (hoisted out of the layer loop).
    feat_ids = jax.lax.broadcasted_iota(jnp.int32, (1, f_pad), 1)
    feat_mask = (feat_ids < f_real).astype(jnp.float32)
    inv_f = jnp.float32(1.0 / float(f_real))

    # global_mean_pool partial sums of the (preprocessed) input x0 (bf16 MXU).
    pooled_ref[:, 0:f_pad] += jnp.dot(onehot_t, x_bf16,
                                      preferred_element_type=jnp.float32)

    for l in range(num_layers):
        # Linear: bf16 MXU inputs, f32 accumulation, f32 bias.
        y = jnp.dot(x.astype(w_ref.dtype), w_ref[l],
                    preferred_element_type=jnp.float32) + b_ref[l]
        # LayerNorm over the real feature lanes (padded lanes of y are exactly
        # zero because W columns / bias are zero-padded; eps = torch 1e-5).
        mean = jnp.sum(y, axis=-1, keepdims=True) * inv_f
        diff = (y - mean) * feat_mask
        var = jnp.sum(diff * diff, axis=-1, keepdims=True) * inv_f
        yn = diff * jax.lax.rsqrt(var + 1e-5) * g_ref[l] + bt_ref[l]
        # PReLU (scalar alpha per layer); Dropout == identity in eval mode.
        a = alpha_ref[l]
        act = jnp.where(yn >= 0.0, yn, a * yn)
        # Per-graph partial pooled sums of the layer output (pre-residual,
        # exactly as the torch forward pools x_temp_out); bf16 MXU inputs.
        pooled_ref[:, (l + 1) * f_pad:(l + 2) * f_pad] += jnp.dot(
            onehot_t, act.astype(jnp.bfloat16),
            preferred_element_type=jnp.float32)
        # Fused residual connection ('Y').
        x = act + x if residual else act


# ---------------------------------------------------------------------------
# Wrapper: padding, tiling, pallas_call, tiny XLA epilogue
# ---------------------------------------------------------------------------
@functools.partial(jax.jit, static_argnames=("num_graphs", "residual"))
def mlp_forward(x, batch, layer_params, Wr, br, *, num_graphs, residual=True):
    # TODO(synk): preprocess(data) is not defined in the reference; identity.
    N, F = x.shape
    L = len(layer_params)
    matmul_dtype = jnp.bfloat16                 # MXU inputs; accumulate in f32
    w_itemsize = jnp.dtype(matmul_dtype).itemsize

    # --- lane/sublane-friendly padded geometry -----------------------------
    lane_mult = 256 if F >= 256 else 128        # fill 256-wide MXUs when F warrants
    F_pad = _round_up(max(F, 128), lane_mult)
    F_cat_pad = (L + 1) * F_pad
    G_pad = _round_up(max(num_graphs, 8), 8)

    # Row tile: as large as the VMEM budget allows (amortizes ~0.35us/step
    # overhead, the one-hot build, and the pooling matmuls).
    tm = None
    if N <= _TM_TARGET:
        tm_try = _round_up(N, 8)
        if _vmem_bytes_estimate(tm_try, F_pad, L, G_pad,
                                w_itemsize) <= _VMEM_BUDGET:
            tm = tm_try
    if tm is None:
        tm = max(128, _round_up(min(_TM_TARGET, N), 128))
        while tm > 128 and _vmem_bytes_estimate(
                tm, F_pad, L, G_pad, w_itemsize) > _VMEM_BUDGET:
            tm //= 2
    N_pad = _round_up(N, tm)
    num_tiles = N_pad // tm

    # --- zero-padded operands ----------------------------------------------
    # Node features shipped in bf16 (halves the dominant input DMA stream).
    x_pad = jnp.zeros((N_pad, F_pad), matmul_dtype).at[:N, :F].set(
        x.astype(matmul_dtype))
    seg = jnp.full((1, N_pad), -1, jnp.int32).at[0, :N].set(
        batch.astype(jnp.int32))

    Ws = jnp.zeros((L, F_pad, F_pad), jnp.float32)
    bs = jnp.zeros((L, 1, F_pad), jnp.float32)
    gs = jnp.zeros((L, 1, F_pad), jnp.float32)
    bts = jnp.zeros((L, 1, F_pad), jnp.float32)
    alphas = []
    for l, (W, b, gamma, beta, alpha) in enumerate(layer_params):
        fi, fo = W.shape
        Ws = Ws.at[l, :fi, :fo].set(W.astype(jnp.float32))
        bs = bs.at[l, 0, :fo].set(b.astype(jnp.float32))
        gs = gs.at[l, 0, :fo].set(gamma.astype(jnp.float32))
        bts = bts.at[l, 0, :fo].set(beta.astype(jnp.float32))
        alphas.append(jnp.ravel(alpha).astype(jnp.float32))
    alphas = jnp.concatenate(alphas)
    Ws = Ws.astype(matmul_dtype)                # bf16 weight copy, made once

    kernel = functools.partial(_fused_mlp_stack_kernel,
                               num_layers=L, f_real=F, residual=residual)

    pooled_sums = pl.pallas_call(
        kernel,
        out_shape=jax.ShapeDtypeStruct((G_pad, F_cat_pad), jnp.float32),
        grid_spec=pltpu.PrefetchScalarGridSpec(
            num_scalar_prefetch=0,
            grid=(num_tiles,),
            in_specs=[
                pl.BlockSpec((tm, F_pad), lambda i: (i, 0)),           # x tile
                pl.BlockSpec((1, tm), lambda i: (0, i)),               # graph ids
                pl.BlockSpec((L, F_pad, F_pad), lambda i: (0, 0, 0)),  # W (resident)
                pl.BlockSpec((L, 1, F_pad), lambda i: (0, 0, 0)),      # bias
                pl.BlockSpec((L, 1, F_pad), lambda i: (0, 0, 0)),      # LN gamma
                pl.BlockSpec((L, 1, F_pad), lambda i: (0, 0, 0)),      # LN beta
                pl.BlockSpec(memory_space=pltpu.SMEM),                 # PReLU alphas
            ],
            # Accumulator output: same block every step -> resident in VMEM,
            # single HBM writeback at the end.
            out_specs=pl.BlockSpec((G_pad, F_cat_pad), lambda i: (0, 0)),
        ),
        compiler_params=pltpu.CompilerParams(
            dimension_semantics=("arbitrary",),
            vmem_limit_bytes=_VMEM_LIMIT),
    )(x_pad, seg, Ws, bs, gs, bts, alphas)

    # --- tiny epilogue in plain XLA -----------------------------------------
    counts = jax.ops.segment_sum(jnp.ones((N,), jnp.float32), batch,
                                 num_segments=G_pad)[:, None]
    pooled_mean = jnp.where(counts > 0.0,
                            pooled_sums / jnp.maximum(counts, 1.0),
                            0.0)                             # empty-graph guard

    # Drop graph/feature padding; rebuild x_concat = [pool(x0), pool(x1), ...].
    x_concat = jnp.concatenate(
        [pooled_mean[:num_graphs, l * F_pad:l * F_pad + F]
         for l in range(L + 1)], axis=1)

    # TODO(synk): postprocess(...) is not defined in the reference; identity.
    # Final risk Linear: tiny [G,(L+1)F]x[(L+1)F,1] matmul -> plain XLA (a
    # standalone pallas_call with a lane-width-1 output would be pure overhead).
    return x_concat @ Wr + br


# ---------------------------------------------------------------------------
if __name__ == "__main__":
    key = jax.random.PRNGKey(0)

    # Small, forward-consistent shapes:
    dim, heads, layer_num = 8, 4, 2          # Argument.initial_dim / heads / layers
    F = dim * heads                          # per-layer feature width = 32
    N, num_graphs = 16, 2                    # 16 nodes, 2 graphs (8 nodes each)
    batch = jnp.array([0] * 8 + [1] * 8, dtype=jnp.int32)

    keys = jax.random.split(key, layer_num + 2)
    x = jax.random.normal(keys[0], (N, F), dtype=jnp.float32)

    # Deterministic parameter init (torch.nn.Linear-style uniform bounds).
    layer_params = []
    for l in range(layer_num):
        kw, kb = jax.random.split(keys[1 + l], 2)
        bound = 1.0 / (F ** 0.5)
        W = jax.random.uniform(kw, (F, F), minval=-bound, maxval=bound,
                               dtype=jnp.float32)
        b = jax.random.uniform(kb, (F,), minval=-bound, maxval=bound,
                               dtype=jnp.float32)
        gamma = jnp.ones((F,), jnp.float32)          # LayerNorm weight
        beta = jnp.zeros((F,), jnp.float32)          # LayerNorm bias
        alpha = jnp.array([0.25], jnp.float32)       # PReLU default alpha
        layer_params.append((W, b, gamma, beta, alpha))
    layer_params = tuple(layer_params)

    F_cat = F * (layer_num + 1)                      # x_concat width = 96
    kw, kb = jax.random.split(keys[-1], 2)
    bound = 1.0 / (F_cat ** 0.5)
    Wr = jax.random.uniform(kw, (F_cat, 1), minval=-bound, maxval=bound,
                            dtype=jnp.float32)
    br = jax.random.uniform(kb, (1,), minval=-bound, maxval=bound,
                            dtype=jnp.float32)

    risk = mlp_forward(x, batch, layer_params, Wr, br,
                       num_graphs=num_graphs, residual=True)
    jax.block_until_ready(risk)
    assert risk.shape == (num_graphs, 1)
    assert bool(jnp.all(jnp.isfinite(risk)))
    print("KERNEL_OK")
</pallas_src>

<mosaic_0001>
module attributes {stable_mosaic.version = 11 : i64} {
  func.func @_fused_mlp_stack_kernel(%arg0: i32, %arg1: memref<16x128xbf16, #tpu.memory_space<vmem>>, %arg2: memref<1x16xi32, #tpu.memory_space<vmem>>, %arg3: memref<2x128x128xbf16, #tpu.memory_space<vmem>>, %arg4: memref<2x1x128xf32, #tpu.memory_space<vmem>>, %arg5: memref<2x1x128xf32, #tpu.memory_space<vmem>>, %arg6: memref<2x1x128xf32, #tpu.memory_space<vmem>>, %arg7: memref<2xf32, #tpu.memory_space<smem>>, %arg8: memref<8x384xf32, #tpu.memory_space<vmem>>) attributes {dimension_semantics = [#tpu.dimension_semantics<arbitrary>], iteration_bounds = array<i64: 1>, scalar_prefetch = 0 : i64, scratch_operands = 0 : i64, tpu.core_type = #tpu.core_type<tc>, window_params = [{transform_indices = @transform_0, window_bounds = array<i64: 16, 128>}, {transform_indices = @transform_1, window_bounds = array<i64: 1, 16>}, {pipeline_mode = #tpu.pipeline_mode<synchronous>, transform_indices = @transform_2, window_bounds = array<i64: 2, 128, 128>}, {pipeline_mode = #tpu.pipeline_mode<synchronous>, transform_indices = @transform_3, window_bounds = array<i64: 2, 1, 128>}, {pipeline_mode = #tpu.pipeline_mode<synchronous>, transform_indices = @transform_4, window_bounds = array<i64: 2, 1, 128>}, {pipeline_mode = #tpu.pipeline_mode<synchronous>, transform_indices = @transform_5, window_bounds = array<i64: 2, 1, 128>}, {transform_indices = @transform_6, window_bounds = array<i64: 2>}, {pipeline_mode = #tpu.pipeline_mode<synchronous>, transform_indices = @transform_7, window_bounds = array<i64: 8, 384>}]} {
    %c0_i32 = arith.constant 0 : i32
    %0 = arith.cmpi eq, %arg0, %c0_i32 : i32
    %1 = arith.extui %0 : i1 to i32
    %c0_i32_0 = arith.constant 0 : i32
    %2 = arith.cmpi ne, %1, %c0_i32_0 : i32
    scf.if %2 {
      %cst_55 = arith.constant 0.000000e+00 : f32
      %112 = vector.broadcast %cst_55 : f32 to vector<8x384xf32>
      %c0_56 = arith.constant 0 : index
      %c0_57 = arith.constant 0 : index
      %113 = vector.load %arg8[%c0_56, %c0_57] : memref<8x384xf32, #tpu.memory_space<vmem>>, vector<8x384xf32>
      tpu.vector_store %arg8[%c0_56, %c0_57], %112 {strides = array<i32>} : memref<8x384xf32, #tpu.memory_space<vmem>>, vector<8x384xf32>,
    } else {
    }
    %c0 = arith.constant 0 : index
    %c0_1 = arith.constant 0 : index
    %3 = vector.load %arg1[%c0, %c0_1] : memref<16x128xbf16, #tpu.memory_space<vmem>>, vector<16x128xbf16>
    %4 = arith.extf %3 : vector<16x128xbf16> to vector<16x128xf32>
    %c0_2 = arith.constant 0 : index
    %c0_3 = arith.constant 0 : index
    %5 = vector.load %arg2[%c0_2, %c0_3] : memref<1x16xi32, #tpu.memory_space<vmem>>, vector<1x16xi32>
    %6 = tpu.iota {dimensions = array<i32: 0>} : vector<8x16xi32>
    %7 = vector.broadcast %5 : vector<1x16xi32> to vector<8x16xi32>
    %8 = arith.cmpi eq, %6, %7 : vector<8x16xi32>
    %9 = arith.extui %8 : vector<8x16xi1> to vector<8x16xi32>
    %10 = arith.sitofp %9 : vector<8x16xi32> to vector<8x16xf32>
    %11 = arith.truncf %10 : vector<8x16xf32> to vector<8x16xbf16>
    %12 = tpu.iota {dimensions = array<i32: 1>} : vector<1x128xi32>
    %c32_i32 = arith.constant 32 : i32
    %13 = vector.broadcast %c32_i32 : i32 to vector<1x128xi32>
    %14 = arith.cmpi slt, %12, %13 : vector<1x128xi32>
    %15 = arith.extui %14 : vector<1x128xi1> to vector<1x128xi32>
    %16 = arith.sitofp %15 : vector<1x128xi32> to vector<1x128xf32>
    %c0_4 = arith.constant 0 : index
    %c0_5 = arith.constant 0 : index
    %17 = vector.load %arg8[%c0_4, %c0_5] : memref<8x384xf32, #tpu.memory_space<vmem>>, vector<8x128xf32>
    %cst = arith.constant dense<0.000000e+00> : vector<8x128xf32>
    %18 = tpu.matmul %11, %3, %cst {dimension_numbers = #tpu.dot_dimension_numbers<[1], [0], [0], [1], [0, 0, 1, 1], [], []>} : vector<8x16xbf16>, vector<16x128xbf16>, vector<8x128xf32> -> vector<8x128xf32>
    %19 = arith.addf %17, %18 : vector<8x128xf32>
    %c0_6 = arith.constant 0 : index
    %c0_7 = arith.constant 0 : index
    %20 = vector.load %arg8[%c0_6, %c0_7] : memref<8x384xf32, #tpu.memory_space<vmem>>, vector<8x128xf32>
    tpu.vector_store %arg8[%c0_6, %c0_7], %19 {strides = array<i32>} : memref<8x384xf32, #tpu.memory_space<vmem>>, vector<8x128xf32>,
    %21 = arith.truncf %4 : vector<16x128xf32> to vector<16x128xbf16>
    %c0_8 = arith.constant 0 : index
    %c0_9 = arith.constant 0 : index
    %c0_10 = arith.constant 0 : index
    %22 = vector.load %arg3[%c0_8, %c0_9, %c0_10] : memref<2x128x128xbf16, #tpu.memory_space<vmem>>, vector<1x128x128xbf16>
    %23 = vector.shape_cast %22 : vector<1x128x128xbf16> to vector<128x128xbf16>
    %cst_11 = arith.constant dense<0.000000e+00> : vector<16x128xf32>
    %24 = tpu.matmul %21, %23, %cst_11 {dimension_numbers = #tpu.dot_dimension_numbers<[1], [0], [0], [1], [0, 0, 1, 1], [], []>} : vector<16x128xbf16>, vector<128x128xbf16>, vector<16x128xf32> -> vector<16x128xf32>
    %c0_12 = arith.constant 0 : index
    %c0_13 = arith.constant 0 : index
    %c0_14 = arith.constant 0 : index
    %25 = vector.load %arg4[%c0_12, %c0_13, %c0_14] : memref<2x1x128xf32, #tpu.memory_space<vmem>>, vector<1x1x128xf32>
    %26 = vector.shape_cast %25 : vector<1x1x128xf32> to vector<1x128xf32>
    %27 = vector.broadcast %26 : vector<1x128xf32> to vector<16x128xf32>
    %28 = arith.addf %24, %27 : vector<16x128xf32>
    %cst_15 = arith.constant dense<0.000000e+00> : vector<16xf32>
    %29 = vector.multi_reduction <add>, %28, %cst_15 [1] : vector<16x128xf32> to vector<16xf32>
    %30 = vector.shape_cast %29 : vector<16xf32> to vector<16x1xf32>
    %cst_16 = arith.constant 3.125000e-02 : f32
    %31 = vector.broadcast %cst_16 : f32 to vector<16x1xf32>
    %32 = arith.mulf %30, %31 : vector<16x1xf32>
    %33 = vector.broadcast %32 : vector<16x1xf32> to vector<16x128xf32>
    %34 = arith.subf %28, %33 : vector<16x128xf32>
    %35 = vector.broadcast %16 : vector<1x128xf32> to vector<16x128xf32>
    %36 = arith.mulf %34, %35 : vector<16x128xf32>
    %37 = arith.mulf %36, %36 : vector<16x128xf32>
    %cst_17 = arith.constant dense<0.000000e+00> : vector<16xf32>
    %38 = vector.multi_reduction <add>, %37, %cst_17 [1] : vector<16x128xf32> to vector<16xf32>
    %39 = vector.shape_cast %38 : vector<16xf32> to vector<16x1xf32>
    %cst_18 = arith.constant 3.125000e-02 : f32
    %40 = vector.broadcast %cst_18 : f32 to vector<16x1xf32>
    %41 = arith.mulf %39, %40 : vector<16x1xf32>
    %cst_19 = arith.constant 9.99999974E-6 : f32
    %42 = vector.broadcast %cst_19 : f32 to vector<16x1xf32>
    %43 = arith.addf %41, %42 : vector<16x1xf32>
    %44 = math.rsqrt %43 : vector<16x1xf32>
    %45 = vector.broadcast %44 : vector<16x1xf32> to vector<16x128xf32>
    %46 = arith.mulf %36, %45 : vector<16x128xf32>
    %c0_20 = arith.constant 0 : index
    %c0_21 = arith.constant 0 : index
    %c0_22 = arith.constant 0 : index
    %47 = vector.load %arg5[%c0_20, %c0_21, %c0_22] : memref<2x1x128xf32, #tpu.memory_space<vmem>>, vector<1x1x128xf32>
    %48 = vector.shape_cast %47 : vector<1x1x128xf32> to vector<1x128xf32>
    %49 = vector.broadcast %48 : vector<1x128xf32> to vector<16x128xf32>
    %50 = arith.mulf %46, %49 : vector<16x128xf32>
    %c0_23 = arith.constant 0 : index
    %c0_24 = arith.constant 0 : index
    %c0_25 = arith.constant 0 : index
    %51 = vector.load %arg6[%c0_23, %c0_24, %c0_25] : memref<2x1x128xf32, #tpu.memory_space<vmem>>, vector<1x1x128xf32>
    %52 = vector.shape_cast %51 : vector<1x1x128xf32> to vector<1x128xf32>
    %53 = vector.broadcast %52 : vector<1x128xf32> to vector<16x128xf32>
    %54 = arith.addf %50, %53 : vector<16x128xf32>
    %c0_26 = arith.constant 0 : index
    %55 = memref.load %arg7[%c0_26] : memref<2xf32, #tpu.memory_space<smem>>
    %cst_27 = arith.constant 0.000000e+00 : f32
    %56 = vector.broadcast %cst_27 : f32 to vector<16x128xf32>
    %57 = arith.cmpf oge, %54, %56 : vector<16x128xf32>
    %58 = vector.broadcast %55 : f32 to vector<16x128xf32>
    %59 = arith.mulf %58, %54 : vector<16x128xf32>
    %60 = arith.select %57, %54, %59 : vector<16x128xi1>, vector<16x128xf32>
    %c0_28 = arith.constant 0 : index
    %c128 = arith.constant 128 : index
    %61 = vector.load %arg8[%c0_28, %c128] : memref<8x384xf32, #tpu.memory_space<vmem>>, vector<8x128xf32>
    %62 = arith.truncf %60 : vector<16x128xf32> to vector<16x128xbf16>
    %cst_29 = arith.constant dense<0.000000e+00> : vector<8x128xf32>
    %63 = tpu.matmul %11, %62, %cst_29 {dimension_numbers = #tpu.dot_dimension_numbers<[1], [0], [0], [1], [0, 0, 1, 1], [], []>} : vector<8x16xbf16>, vector<16x128xbf16>, vector<8x128xf32> -> vector<8x128xf32>
    %64 = arith.addf %61, %63 : vector<8x128xf32>
    %c0_30 = arith.constant 0 : index
    %c128_31 = arith.constant 128 : index
    %65 = vector.load %arg8[%c0_30, %c128_31] : memref<8x384xf32, #tpu.memory_space<vmem>>, vector<8x128xf32>
    tpu.vector_store %arg8[%c0_30, %c128_31], %64 {strides = array<i32>} : memref<8x384xf32, #tpu.memory_space<vmem>>, vector<8x128xf32>,
    %66 = arith.addf %60, %4 : vector<16x128xf32>
    %67 = arith.truncf %66 : vector<16x128xf32> to vector<16x128xbf16>
    %c1 = arith.constant 1 : index
    %c0_32 = arith.constant 0 : index
    %c0_33 = arith.constant 0 : index
    %68 = vector.load %arg3[%c1, %c0_32, %c0_33] : memref<2x128x128xbf16, #tpu.memory_space<vmem>>, vector<1x128x128xbf16>
    %69 = vector.shape_cast %68 : vector<1x128x128xbf16> to vector<128x128xbf16>
    %cst_34 = arith.constant dense<0.000000e+00> : vector<16x128xf32>
    %70 = tpu.matmul %67, %69, %cst_34 {dimension_numbers = #tpu.dot_dimension_numbers<[1], [0], [0], [1], [0, 0, 1, 1], [], []>} : vector<16x128xbf16>, vector<128x128xbf16>, vector<16x128xf32> -> vector<16x128xf32>
    %c1_35 = arith.constant 1 : index
    %c0_36 = arith.constant 0 : index
    %c0_37 = arith.constant 0 : index
    %71 = vector.load %arg4[%c1_35, %c0_36, %c0_37] : memref<2x1x128xf32, #tpu.memory_space<vmem>>, vector<1x1x128xf32>
    %72 = vector.shape_cast %71 : vector<1x1x128xf32> to vector<1x128xf32>
    %73 = vector.broadcast %72 : vector<1x128xf32> to vector<16x128xf32>
    %74 = arith.addf %70, %73 : vector<16x128xf32>
    %cst_38 = arith.constant dense<0.000000e+00> : vector<16xf32>
    %75 = vector.multi_reduction <add>, %74, %cst_38 [1] : vector<16x128xf32> to vector<16xf32>
    %76 = vector.shape_cast %75 : vector<16xf32> to vector<16x1xf32>
    %cst_39 = arith.constant 3.125000e-02 : f32
    %77 = vector.broadcast %cst_39 : f32 to vector<16x1xf32>
    %78 = arith.mulf %76, %77 : vector<16x1xf32>
    %79 = vector.broadcast %78 : vector<16x1xf32> to vector<16x128xf32>
    %80 = arith.subf %74, %79 : vector<16x128xf32>
    %81 = vector.broadcast %16 : vector<1x128xf32> to vector<16x128xf32>
    %82 = arith.mulf %80, %81 : vector<16x128xf32>
    %83 = arith.mulf %82, %82 : vector<16x128xf32>
    %cst_40 = arith.constant dense<0.000000e+00> : vector<16xf32>
    %84 = vector.multi_reduction <add>, %83, %cst_40 [1] : vector<16x128xf32> to vector<16xf32>
    %85 = vector.shape_cast %84 : vector<16xf32> to vector<16x1xf32>
    %cst_41 = arith.constant 3.125000e-02 : f32
    %86 = vector.broadcast %cst_41 : f32 to vector<16x1xf32>
    %87 = arith.mulf %85, %86 : vector<16x1xf32>
    %cst_42 = arith.constant 9.99999974E-6 : f32
    %88 = vector.broadcast %cst_42 : f32 to vector<16x1xf32>
    %89 = arith.addf %87, %88 : vector<16x1xf32>
    %90 = math.rsqrt %89 : vector<16x1xf32>
    %91 = vector.broadcast %90 : vector<16x1xf32> to vector<16x128xf32>
    %92 = arith.mulf %82, %91 : vector<16x128xf32>
    %c1_43 = arith.constant 1 : index
    %c0_44 = arith.constant 0 : index
    %c0_45 = arith.constant 0 : index
    %93 = vector.load %arg5[%c1_43, %c0_44, %c0_45] : memref<2x1x128xf32, #tpu.memory_space<vmem>>, vector<1x1x128xf32>
    %94 = vector.shape_cast %93 : vector<1x1x128xf32> to vector<1x128xf32>
    %95 = vector.broadcast %94 : vector<1x128xf32> to vector<16x128xf32>
    %96 = arith.mulf %92, %95 : vector<16x128xf32>
    %c1_46 = arith.constant 1 : index
    %c0_47 = arith.constant 0 : index
    %c0_48 = arith.constant 0 : index
    %97 = vector.load %arg6[%c1_46, %c0_47, %c0_48] : memref<2x1x128xf32, #tpu.memory_space<vmem>>, vector<1x1x128xf32>
    %98 = vector.shape_cast %97 : vector<1x1x128xf32> to vector<1x128xf32>
    %99 = vector.broadcast %98 : vector<1x128xf32> to vector<16x128xf32>
    %100 = arith.addf %96, %99 : vector<16x128xf32>
    %c1_49 = arith.constant 1 : index
    %101 = memref.load %arg7[%c1_49] : memref<2xf32, #tpu.memory_space<smem>>
    %cst_50 = arith.constant 0.000000e+00 : f32
    %102 = vector.broadcast %cst_50 : f32 to vector<16x128xf32>
    %103 = arith.cmpf oge, %100, %102 : vector<16x128xf32>
    %104 = vector.broadcast %101 : f32 to vector<16x128xf32>
    %105 = arith.mulf %104, %100 : vector<16x128xf32>
    %106 = arith.select %103, %100, %105 : vector<16x128xi1>, vector<16x128xf32>
    %c0_51 = arith.constant 0 : index
    %c256 = arith.constant 256 : index
    %107 = vector.load %arg8[%c0_51, %c256] : memref<8x384xf32, #tpu.memory_space<vmem>>, vector<8x128xf32>
    %108 = arith.truncf %106 : vector<16x128xf32> to vector<16x128xbf16>
    %cst_52 = arith.constant dense<0.000000e+00> : vector<8x128xf32>
    %109 = tpu.matmul %11, %108, %cst_52 {dimension_numbers = #tpu.dot_dimension_numbers<[1], [0], [0], [1], [0, 0, 1, 1], [], []>} : vector<8x16xbf16>, vector<16x128xbf16>, vector<8x128xf32> -> vector<8x128xf32>
    %110 = arith.addf %107, %109 : vector<8x128xf32>
    %c0_53 = arith.constant 0 : index
    %c256_54 = arith.constant 256 : index
    %111 = vector.load %arg8[%c0_53, %c256_54] : memref<8x384xf32, #tpu.memory_space<vmem>>, vector<8x128xf32>
    tpu.vector_store %arg8[%c0_53, %c256_54], %110 {strides = array<i32>} : memref<8x384xf32, #tpu.memory_space<vmem>>, vector<8x128xf32>,
    return
  }
  func.func @transform_0(%arg0: i32) -> (i32, i32) {
    %c0_i32 = arith.constant 0 : i32
    %c0_i32_0 = arith.constant 0 : i32
    return %arg0, %c0_i32 : i32, i32
  }
  func.func @transform_1(%arg0: i32) -> (i32, i32) {
    %c0_i32 = arith.constant 0 : i32
    %c0_i32_0 = arith.constant 0 : i32
    return %c0_i32, %arg0 : i32, i32
  }
  func.func @transform_2(%arg0: i32) -> (i32, i32, i32) {
    %c0_i32 = arith.constant 0 : i32
    %c0_i32_0 = arith.constant 0 : i32
    %c0_i32_1 = arith.constant 0 : i32
    %c0_i32_2 = arith.constant 0 : i32
    return %c0_i32, %c0_i32_0, %c0_i32_1 : i32, i32, i32
  }
  func.func @transform_3(%arg0: i32) -> (i32, i32, i32) {
    %c0_i32 = arith.constant 0 : i32
    %c0_i32_0 = arith.constant 0 : i32
    %c0_i32_1 = arith.constant 0 : i32
    %c0_i32_2 = arith.constant 0 : i32
    return %c0_i32, %c0_i32_0, %c0_i32_1 : i32, i32, i32
  }
  func.func @transform_4(%arg0: i32) -> (i32, i32, i32) {
    %c0_i32 = arith.constant 0 : i32
    %c0_i32_0 = arith.constant 0 : i32
    %c0_i32_1 = arith.constant 0 : i32
    %c0_i32_2 = arith.constant 0 : i32
    return %c0_i32, %c0_i32_0, %c0_i32_1 : i32, i32, i32
  }
  func.func @transform_5(%arg0: i32) -> (i32, i32, i32) {
    %c0_i32 = arith.constant 0 : i32
    %c0_i32_0 = arith.constant 0 : i32
    %c0_i32_1 = arith.constant 0 : i32
    %c0_i32_2 = arith.constant 0 : i32
    return %c0_i32, %c0_i32_0, %c0_i32_1 : i32, i32, i32
  }
  func.func @transform_6(%arg0: i32) -> i32 {
    %c0_i32 = arith.constant 0 : i32
    %c0_i32_0 = arith.constant 0 : i32
    return %c0_i32 : i32
  }
  func.func @transform_7(%arg0: i32) -> (i32, i32) {
    %c0_i32 = arith.constant 0 : i32
    %c0_i32_0 = arith.constant 0 : i32
    %c0_i32_1 = arith.constant 0 : i32
    return %c0_i32, %c0_i32_0 : i32, i32
  }
}

</mosaic_0001>

<llo_original>
// kernel: mlp_forward.1
$region0: #{mlp_forward.1}
  #allocation0 [shape = 'u32[]', space=smem, size = 0x4, offset = 0x4, fixed_abs, tag = 'smem constant byte address 0x4 - core index']
  #allocation1 [shape = 'u32[72,128]{1,0:T(1,128)}', space=vmem, size = 0x9000, scoped, tag = 'internal scratch']
  %s0 = inlined_call_operand.vmem [shape: bf16[16,128], index: 0, kind: input, shape index: {}]
  %s1 = inlined_call_operand.vmem [shape: s32[1,16], index: 1, kind: input, shape index: {}]
  %s2 = inlined_call_operand.vmem [shape: bf16[2,128,128], index: 2, kind: input, shape index: {}]
  %s3 = inlined_call_operand.vmem [shape: f32[2,1,128], index: 3, kind: input, shape index: {}]
  %s4 = inlined_call_operand.vmem [shape: f32[2,1,128], index: 4, kind: input, shape index: {}]
  %s5 = inlined_call_operand.vmem [shape: f32[2,1,128], index: 5, kind: input, shape index: {}]
  %s6 = inlined_call_operand.vmem [shape: f32[2], index: 6, kind: input, shape index: {}]
  %s7 = inlined_call_operand.vmem [shape: f32[8,384], index: 7, kind: output, shape index: {}]
  %s8 = sld [smem:[#allocation0]]
  $region46: #{mlp_forward.1} parent=0
    _
  %s10 = ssub.s32 1, %s8
  %s11 = scalar_select 0, %s10, %s8
  $region1: #{mlp_forward.1} parent=0
    #allocation2 [shape = 'u8[512]{0}', space=smem, size = 0x200, scoped, tag = 'input window, operand 6, single buffered']
    #allocation3 [shape = 's32[1]{0}', space=sflag, size = 0x4, scoped, tag = 'scoped memory for mlp_forward.1']
    %12 = vsyncpa [#allocation3], 0
    // Predicated region
    $region2: #{mlp_forward.1} parent=1 // pred_check
      _
    $region3: #{mlp_forward.1} parent=1 // pred_check_branch
      %14 = sbr.rel (0) target = $region5
    $region4: #{mlp_forward.1} parent=1 // pred_region
      _
    $region5: #{mlp_forward.1} parent=1 // pred_fallthru
      _
    // Predicated region
    $region6: #{mlp_forward.1} parent=1 // pred_check
      _
    $region7: #{mlp_forward.1} parent=1 // pred_check_branch
      %16 = sbr.rel (0) target = $region9
    $region8: #{mlp_forward.1} parent=1 // pred_region
      _
    $region9: #{mlp_forward.1} parent=1 // pred_fallthru
      _
    // Predicated region
    $region10: #{mlp_forward.1} parent=1 // pred_check
      _
    $region11: #{mlp_forward.1} parent=1 // pred_check_branch
      %18 = sbr.rel (0) target = $region13
    $region12: #{mlp_forward.1} parent=1 // pred_region
      _
    $region13: #{mlp_forward.1} parent=1 // pred_fallthru
      _
    // Predicated region
    $region14: #{mlp_forward.1} parent=1 // pred_check
      _
    $region15: #{mlp_forward.1} parent=1 // pred_check_branch
      %20 = sbr.rel (0) target = $region17
    $region16: #{mlp_forward.1} parent=1 // pred_region
      _
    $region17: #{mlp_forward.1} parent=1 // pred_fallthru
      _
    // Predicated region
    $region18: #{mlp_forward.1} parent=1 // pred_check
      _
    $region19: #{mlp_forward.1} parent=1 // pred_check_branch
      %22 = sbr.rel (0) target = $region21
    $region20: #{mlp_forward.1} parent=1 // pred_region
      _
    $region21: #{mlp_forward.1} parent=1 // pred_fallthru
      _
    // Predicated region
    $region22: #{mlp_forward.1} parent=1 // pred_check
      _
    $region23: #{mlp_forward.1} parent=1 // pred_check_branch
      %24 = sbr.rel (0) target = $region25
    $region24: #{mlp_forward.1} parent=1 // pred_region
      _
    $region25: #{mlp_forward.1} parent=1 // pred_fallthru
      _
    // Predicated region
    $region26: #{mlp_forward.1} parent=1 // pred_check
      _
    $region27: #{mlp_forward.1} parent=1 // pred_check_branch
      %26 = sbr.rel (0) target = $region29
    $region28: #{mlp_forward.1} parent=1 // pred_region
      %28 = vsyncadd [#allocation3], 0
      %s30 = sshll.u32 %s6, 4
      %s31 = int_to_ptr.vmem [resolvable:$true] %s30
      %33 = dma.vmem_to_smem %s31, 16, [#allocation2], [#allocation3]
    $region29: #{mlp_forward.1} parent=1 // pred_fallthru
      _
    // Predicated region
    $region30: #{mlp_forward.1} parent=1 // pred_check
      _
    $region31: #{mlp_forward.1} parent=1 // pred_check_branch
      %35 = sbr.rel (0) target = $region33
    $region32: #{mlp_forward.1} parent=1 // pred_region
      %37 = dma.done [#allocation3], 16
    $region33: #{mlp_forward.1} parent=1 // pred_fallthru
      _
    %38 = sfence
    %p40 = scmp.eq.s32.totalorder 0, 0
    // Predicated region
    $region34: #{mlp_forward.1} parent=1 // pred_check
      %p41 = pneg %p40
    $region35: #{mlp_forward.1} parent=1 // pred_check_branch
      %43 = sbr.rel (%p41) target = $region37
    $region36: #{mlp_forward.1} parent=1 // pred_region
      %44 = vst [vmem:[%s7] sm:$0xff] 0.0
      %45 = vst [vmem:[%s7 + $0x8] sm:$0xff] 0.0
      %46 = vst [vmem:[%s7 + $0x10] sm:$0xff] 0.0
    $region37: #{mlp_forward.1} parent=1 // pred_fallthru
      _
    %v47 = vld [vmem:[%s0] sm:$0xf]
    %v48 = vld [vmem:[%s0 + $0x4] sm:$0xf]
    %v49 = vunpack.c.l.bf16 %v47
    %v50 = vunpack.c.l.bf16 %v48
    %v51 = vld [vmem:[%s1] sm:$0x1]
    %v52 = vlaneseq
    %v53 = vshrl.u32 %v52, 7
    %v54 = vperm.slane %v51, 0
    %vm55 = vcmp.eq.s32.totalorder %v53, %v54
    %v56 = vsel %vm55, 1, 0
    %v57 = vcvt.s32.f32 %v56
    %v58 = vpack.c.bf16 %v57, %v57
    %v59 = vlaneseq
    %v60 = vand.u32 %v59, 127
    %vm61 = vcmp.lt.s32.totalorder %v60, 32
    %v62 = vsel %vm61, 1, 0
    %v63 = vcvt.s32.f32 %v62
    %v64 = vld [vmem:[%s7] sm:$0xff]
    %v67 = vunpack.c.l.b16 %v47
    %v68 = vunpack.c.l.b16 %v48
    %v69 = vpack.c.b16 %v68, %v67
    %vm71 = vcmask 130048
    %v73 = vsel %vm71, %v58, 0
    %75 = vmatpush.bf16.msra.mxu0 0
    %76 = vmatpush.bf16.msra.mxu0 0
    %77 = vmatpush.bf16.msra.mxu0 0
    %78 = vmatpush.bf16.msra.mxu0 0
    %79 = vmatpush.bf16.msra.mxu0 0
    %80 = vmatpush.bf16.msra.mxu0 0
    %81 = vmatpush.bf16.msra.mxu0 0
    %82 = vmatpush.bf16.msra.mxu0 %v69
    %83 = vmatmul.bf16.gmra.mxu0 %v73
    %v84 = vpop.f32.mrf.mxu0
    %v85 = vadd.f32 0.0, %v84
    %v86 = vpop.f32.mrf.mxu0
    %87 = vdwg.mxu0
    %v88 = vadd.f32 %v64, %v85
    %89 = vst [vmem:[%s7] sm:$0xff] %v88
    %v90 = vld [vmem:[%s2] sm:$0xf]
    %v91 = vld [vmem:[%s2 + $0x4] sm:$0xf]
    %v92 = vld [vmem:[%s2 + $0x8] sm:$0xf]
    %v93 = vld [vmem:[%s2 + $0xc] sm:$0xf]
    %v94 = vld [vmem:[%s2 + $0x10] sm:$0xf]
    %v95 = vld [vmem:[%s2 + $0x14] sm:$0xf]
    %v96 = vld [vmem:[%s2 + $0x18] sm:$0xf]
    %v97 = vld [vmem:[%s2 + $0x1c] sm:$0xf]
    %v98 = vld [vmem:[%s2 + $0x20] sm:$0xf]
    %v99 = vld [vmem:[%s2 + $0x24] sm:$0xf]
    %v100 = vld [vmem:[%s2 + $0x28] sm:$0xf]
    %v101 = vld [vmem:[%s2 + $0x2c] sm:$0xf]
    %v102 = vld [vmem:[%s2 + $0x30] sm:$0xf]
    %v103 = vld [vmem:[%s2 + $0x34] sm:$0xf]
    %v104 = vld [vmem:[%s2 + $0x38] sm:$0xf]
    %v105 = vld [vmem:[%s2 + $0x3c] sm:$0xf]
    %v106 = vld [vmem:[%s3] sm:$0x1]
    %v108 = vperm.slane %v106, 0
    %v126 = vunpack.c.l.b16 %v90
    %v127 = vunpack.c.l.b16 %v91
    %v128 = vunpack.c.l.b16 %v92
    %v129 = vunpack.c.l.b16 %v93
    %v130 = vunpack.c.l.b16 %v94
    %v131 = vunpack.c.l.b16 %v95
    %v132 = vunpack.c.l.b16 %v96
    %v133 = vunpack.c.l.b16 %v97
    %v134 = vunpack.c.l.b16 %v98
    %v135 = vunpack.c.l.b16 %v99
    %v136 = vunpack.c.l.b16 %v100
    %v137 = vunpack.c.l.b16 %v101
    %v138 = vunpack.c.l.b16 %v102
    %v139 = vunpack.c.l.b16 %v103
    %v140 = vunpack.c.l.b16 %v104
    %v141 = vunpack.c.l.b16 %v105
    %v142 = vpack.c.b16 %v127, %v126
    %v143 = vpack.c.b16 %v129, %v128
    %v144 = vpack.c.b16 %v131, %v130
    %v145 = vpack.c.b16 %v133, %v132
    %v146 = vpack.c.b16 %v135, %v134
    %v147 = vpack.c.b16 %v137, %v136
    %v148 = vpack.c.b16 %v139, %v138
    %v149 = vpack.c.b16 %v141, %v140
    %158 = vmatpush.bf16.msra.mxu0 %v149
    %159 = vmatpush.bf16.msra.mxu0 %v148
    %160 = vmatpush.bf16.msra.mxu0 %v147
    %161 = vmatpush.bf16.msra.mxu0 %v146
    %162 = vmatpush.bf16.msra.mxu0 %v145
    %163 = vmatpush.bf16.msra.mxu0 %v144
    %164 = vmatpush.bf16.msra.mxu0 %v143
    %165 = vmatpush.bf16.msra.mxu0 %v142
    %166 = vmatmul.bf16.gmra.mxu0 %v69
    %v167 = vpop.f32.mrf.mxu0
    %v168 = vadd.f32 %v108, %v167
    %v169 = vpop.f32.mrf.mxu0
    %v170 = vadd.f32 %v108, %v169
    %171 = vdwg.mxu0
    %172 = vadd.xlane.f32.xlu0 %v168
    %v173 = vpop.xlane.xlu0 %172
    %174 = vadd.xlane.f32.xlu0 %v170
    %v175 = vpop.xlane.xlu0 %174
    %v176 = vmul.f32 %v173, 0.03125
    %v177 = vmul.f32 %v175, 0.03125
    %v178 = vsub.f32 %v168, %v176
    %v179 = vsub.f32 %v170, %v177
    %v180 = vmul.f32 %v178, %v63
    %v181 = vmul.f32 %v179, %v63
    %v182 = vmul.f32 %v180, %v180
    %v183 = vmul.f32 %v181, %v181
    %184 = vadd.xlane.f32.xlu0 %v182
    %v185 = vpop.xlane.xlu0 %184
    %186 = vadd.xlane.f32.xlu0 %v183
    %v187 = vpop.xlane.xlu0 %186
    %v188 = vmul.f32 %v185, 0.03125
    %v189 = vmul.f32 %v187, 0.03125
    %v190 = vadd.f32 %v188, 1e-05
    %v191 = vadd.f32 %v189, 1e-05
    %v192 = vrsqrt.pop %v190
    %v193 = vmul.f32 %v192, %v190
    %v194 = vmul.f32 %v193, %v192
    %v195 = vmul.f32 0.5, %v194
    %v196 = vsub.f32 1.5, %v195
    %v197 = vmul.f32 %v192, %v196
    %vm198 = vweird.f32 %v190
    %vm199 = vweird.f32 %v192
    %vm200 = vmor %vm198, %vm199
    %v201 = vsel %vm200, %v192, %v197
    %v202 = vrsqrt.pop %v191
    %v203 = vmul.f32 %v202, %v191
    %v204 = vmul.f32 %v203, %v202
    %v205 = vmul.f32 0.5, %v204
    %v206 = vsub.f32 1.5, %v205
    %v207 = vmul.f32 %v202, %v206
    %vm208 = vweird.f32 %v191
    %vm209 = vweird.f32 %v202
    %vm210 = vmor %vm208, %vm209
    %v211 = vsel %vm210, %v202, %v207
    %v212 = vmul.f32 %v180, %v201
    %v213 = vmul.f32 %v181, %v211
    %v214 = vld [vmem:[%s4] sm:$0x1]
    %v216 = vperm.slane %v214, 0
    %v218 = vmul.f32 %v212, %v216
    %v219 = vmul.f32 %v213, %v216
    %v220 = vld [vmem:[%s5] sm:$0x1]
    %v222 = vperm.slane %v220, 0
    %v224 = vadd.f32 %v218, %v222
    %v225 = vadd.f32 %v219, %v222
    %s226 = sld [smem:[#allocation2]]
    %vm227 = vcmp.ge.f32.partialorder %v224, 0.0
    %vm228 = vcmp.ge.f32.partialorder %v225, 0.0
    %v229 = vstv %s226
    %v230 = vmul.f32 %v229, %v224
    %v231 = vmul.f32 %v229, %v225
    %v232 = vsel %vm227, %v224, %v230
    %v233 = vsel %vm228, %v225, %v231
    %v234 = vld [vmem:[%s7 + $0x8] sm:$0xff]
    %v235 = vpack.c.bf16 %v233, %v232
    %236 = vmatpush.bf16.msra.mxu0 0
    %237 = vmatpush.bf16.msra.mxu0 0
    %238 = vmatpush.bf16.msra.mxu0 0
    %239 = vmatpush.bf16.msra.mxu0 0
    %240 = vmatpush.bf16.msra.mxu0 0
    %241 = vmatpush.bf16.msra.mxu0 0
    %242 = vmatpush.bf16.msra.mxu0 0
    %243 = vmatpush.bf16.msra.mxu0 %v235
    %244 = vmatmul.bf16.gmra.mxu0 %v73
    %v245 = vpop.f32.mrf.mxu0
    %v246 = vadd.f32 0.0, %v245
    %v247 = vpop.f32.mrf.mxu0
    %248 = vdwg.mxu0
    %v249 = vadd.f32 %v234, %v246
    %250 = vst [vmem:[%s7 + $0x8] sm:$0xff] %v249
    %v251 = vadd.f32 %v232, %v49
    %v252 = vadd.f32 %v233, %v50
    %v253 = vpack.c.bf16 %v252, %v251
    %s254 = scalar_lea.vmem %s2, 64
    %v255 = vld [vmem:[%s254] sm:$0xf]
    %v256 = vld [vmem:[%s254 + $0x4] sm:$0xf]
    %v257 = vld [vmem:[%s254 + $0x8] sm:$0xf]
    %v258 = vld [vmem:[%s254 + $0xc] sm:$0xf]
    %v259 = vld [vmem:[%s254 + $0x10] sm:$0xf]
    %v260 = vld [vmem:[%s254 + $0x14] sm:$0xf]
    %v261 = vld [vmem:[%s254 + $0x18] sm:$0xf]
    %v262 = vld [vmem:[%s254 + $0x1c] sm:$0xf]
    %v263 = vld [vmem:[%s254 + $0x20] sm:$0xf]
    %v264 = vld [vmem:[%s254 + $0x24] sm:$0xf]
    %v265 = vld [vmem:[%s254 + $0x28] sm:$0xf]
    %v266 = vld [vmem:[%s254 + $0x2c] sm:$0xf]
    %v267 = vld [vmem:[%s254 + $0x30] sm:$0xf]
    %v268 = vld [vmem:[%s254 + $0x34] sm:$0xf]
    %v269 = vld [vmem:[%s254 + $0x38] sm:$0xf]
    %v270 = vld [vmem:[%s254 + $0x3c] sm:$0xf]
    %s271 = scalar_lea.vmem %s3, 1
    %v272 = vld [vmem:[%s271] sm:$0x1]
    %v274 = vperm.slane %v272, 0
    %v292 = vunpack.c.l.b16 %v255
    %v293 = vunpack.c.l.b16 %v256
    %v294 = vunpack.c.l.b16 %v257
    %v295 = vunpack.c.l.b16 %v258
    %v296 = vunpack.c.l.b16 %v259
    %v297 = vunpack.c.l.b16 %v260
    %v298 = vunpack.c.l.b16 %v261
    %v299 = vunpack.c.l.b16 %v262
    %v300 = vunpack.c.l.b16 %v263
    %v301 = vunpack.c.l.b16 %v264
    %v302 = vunpack.c.l.b16 %v265
    %v303 = vunpack.c.l.b16 %v266
    %v304 = vunpack.c.l.b16 %v267
    %v305 = vunpack.c.l.b16 %v268
    %v306 = vunpack.c.l.b16 %v269
    %v307 = vunpack.c.l.b16 %v270
    %v308 = vpack.c.b16 %v293, %v292
    %v309 = vpack.c.b16 %v295, %v294
    %v310 = vpack.c.b16 %v297, %v296
    %v311 = vpack.c.b16 %v299, %v298
    %v312 = vpack.c.b16 %v301, %v300
    %v313 = vpack.c.b16 %v303, %v302
    %v314 = vpack.c.b16 %v305, %v304
    %v315 = vpack.c.b16 %v307, %v306
    %324 = vmatpush.bf16.msra.mxu0 %v315
    %325 = vmatpush.bf16.msra.mxu0 %v314
    %326 = vmatpush.bf16.msra.mxu0 %v313
    %327 = vmatpush.bf16.msra.mxu0 %v312
    %328 = vmatpush.bf16.msra.mxu0 %v311
    %329 = vmatpush.bf16.msra.mxu0 %v310
    %330 = vmatpush.bf16.msra.mxu0 %v309
    %331 = vmatpush.bf16.msra.mxu0 %v308
    %332 = vmatmul.bf16.gmra.mxu0 %v253
    %v333 = vpop.f32.mrf.mxu0
    %v334 = vadd.f32 %v274, %v333
    %v335 = vpop.f32.mrf.mxu0
    %v336 = vadd.f32 %v274, %v335
    %337 = vdwg.mxu0
    %338 = vadd.xlane.f32.xlu0 %v334
    %v339 = vpop.xlane.xlu0 %338
    %340 = vadd.xlane.f32.xlu0 %v336
    %v341 = vpop.xlane.xlu0 %340
    %v342 = vmul.f32 %v339, 0.03125
    %v343 = vmul.f32 %v341, 0.03125
    %v344 = vsub.f32 %v334, %v342
    %v345 = vsub.f32 %v336, %v343
    %v346 = vmul.f32 %v344, %v63
    %v347 = vmul.f32 %v345, %v63
    %v348 = vmul.f32 %v346, %v346
    %v349 = vmul.f32 %v347, %v347
    %350 = vadd.xlane.f32.xlu0 %v348
    %v351 = vpop.xlane.xlu0 %350
    %352 = vadd.xlane.f32.xlu0 %v349
    %v353 = vpop.xlane.xlu0 %352
    %v354 = vmul.f32 %v351, 0.03125
    %v355 = vmul.f32 %v353, 0.03125
    %v356 = vadd.f32 %v354, 1e-05
    %v357 = vadd.f32 %v355, 1e-05
    %v358 = vrsqrt.pop %v356
    %v359 = vmul.f32 %v358, %v356
    %v360 = vmul.f32 %v359, %v358
    %v361 = vmul.f32 0.5, %v360
    %v362 = vsub.f32 1.5, %v361
    %v363 = vmul.f32 %v358, %v362
    %vm364 = vweird.f32 %v356
    %vm365 = vweird.f32 %v358
    %vm366 = vmor %vm364, %vm365
    %v367 = vsel %vm366, %v358, %v363
    %v368 = vrsqrt.pop %v357
    %v369 = vmul.f32 %v368, %v357
    %v370 = vmul.f32 %v369, %v368
    %v371 = vmul.f32 0.5, %v370
    %v372 = vsub.f32 1.5, %v371
    %v373 = vmul.f32 %v368, %v372
    %vm374 = vweird.f32 %v357
    %vm375 = vweird.f32 %v368
    %vm376 = vmor %vm374, %vm375
    %v377 = vsel %vm376, %v368, %v373
    %v378 = vmul.f32 %v346, %v367
    %v379 = vmul.f32 %v347, %v377
    %s380 = scalar_lea.vmem %s4, 1
    %v381 = vld [vmem:[%s380] sm:$0x1]
    %v383 = vperm.slane %v381, 0
    %v385 = vmul.f32 %v378, %v383
    %v386 = vmul.f32 %v379, %v383
    %s387 = scalar_lea.vmem %s5, 1
    %v388 = vld [vmem:[%s387] sm:$0x1]
    %v390 = vperm.slane %v388, 0
    %v392 = vadd.f32 %v385, %v390
    %v393 = vadd.f32 %v386, %v390
    %s394 = sld [smem:[#allocation2 + $0x1]]
    %vm395 = vcmp.ge.f32.partialorder %v392, 0.0
    %vm396 = vcmp.ge.f32.partialorder %v393, 0.0
    %v397 = vstv %s394
    %v398 = vmul.f32 %v397, %v392
    %v399 = vmul.f32 %v397, %v393
    %v400 = vsel %vm395, %v392, %v398
    %v401 = vsel %vm396, %v393, %v399
    %v402 = vld [vmem:[%s7 + $0x10] sm:$0xff]
    %v403 = vpack.c.bf16 %v401, %v400
    %404 = vmatpush.bf16.msra.mxu0 0
    %405 = vmatpush.bf16.msra.mxu0 0
    %406 = vmatpush.bf16.msra.mxu0 0
    %407 = vmatpush.bf16.msra.mxu0 0
    %408 = vmatpush.bf16.msra.mxu0 0
    %409 = vmatpush.bf16.msra.mxu0 0
    %410 = vmatpush.bf16.msra.mxu0 0
    %411 = vmatpush.bf16.msra.mxu0 %v403
    %412 = vmatmul.bf16.gmra.mxu0 %v73
    %v413 = vpop.f32.mrf.mxu0
    %v414 = vadd.f32 0.0, %v413
    %v415 = vpop.f32.mrf.mxu0
    %416 = vdwg.mxu0
    %v417 = vadd.f32 %v402, %v414
    %418 = vst [vmem:[%s7 + $0x10] sm:$0xff] %v417
    // Predicated region
    $region38: #{mlp_forward.1} parent=1 // pred_check
      _
    $region39: #{mlp_forward.1} parent=1 // pred_check_branch
      %420 = sbr.rel (0) target = $region41
    $region40: #{mlp_forward.1} parent=1 // pred_region
      _
    $region41: #{mlp_forward.1} parent=1 // pred_fallthru
      _
    // Predicated region
    $region42: #{mlp_forward.1} parent=1 // pred_check
      _
    $region43: #{mlp_forward.1} parent=1 // pred_check_branch
      %422 = sbr.rel (0) target = $region45
    $region44: #{mlp_forward.1} parent=1 // pred_region
      _
    $region45: #{mlp_forward.1} parent=1 // pred_fallthru
      _
    %423 = vsyncpa [#allocation3], 1

</llo_original>
